<compile_context>
chip_gen: v7x
topology: tpu7x:2x2x1
jax: 0.10.0
libtpu: 0.0.40
codegen_flags: <defaults>
</compile_context>

<pallas_src>
import math

import jax
import jax.numpy as jnp
from jax.experimental import pallas as pl
from jax.experimental.pallas import tpu as pltpu


def _center_band(module_size: int) -> jnp.ndarray:
    """1-D indicator of the central band, identical to the torch slicing."""
    center = int(module_size / 2)
    radius = math.ceil(module_size / 6)
    ind = jnp.zeros((module_size,), dtype=jnp.float32)
    ind = ind.at[center - radius:center + radius].set(1.0)
    return ind


def _region_mean_kernel(x_ref, r_ref, c_ref, o_ref):
    # x_ref: (H, W) one image, r_ref: (Ho, H), c_ref: (W, Wo), o_ref: (Ho, Wo)
    x = x_ref[...].astype(jnp.float32)
    t = jnp.dot(r_ref[...], x, preferred_element_type=jnp.float32)   # (Ho, W)
    y = jnp.dot(t, c_ref[...], preferred_element_type=jnp.float32)   # (Ho, Wo)
    o_ref[...] = y.astype(o_ref.dtype)


def region_mean_filter(x: jnp.ndarray, module_size: int) -> jnp.ndarray:
    """x: (N, 1, H, W) NCHW -> (N, 1, H//m, W//m), matching the PyTorch module."""
    N, C, H, W = x.shape
    assert C == 1, "RegionMeanFilter expects a single input channel"
    m = module_size
    Ho, Wo = H // m, W // m
    assert Ho >= 1 and Wo >= 1, "module_size larger than the image"

    # Conv2d with stride == kernel silently drops the remainder rows/cols.
    x2 = x[:, 0, :Ho * m, :Wo * m]          # (N, H', W')  -- view/reshape only
    Hc, Wc = Ho * m, Wo * m

    # Separable 1-D weight u; outer(u, u) == the module's 2-D conv weight.
    ind = _center_band(m)
    u = ind / jnp.sum(ind)                                            # (m,)
    R = jnp.kron(jnp.eye(Ho, dtype=jnp.float32), u[None, :])          # (Ho, Hc)
    Cmat = jnp.kron(jnp.eye(Wo, dtype=jnp.float32), u[:, None])       # (Wc, Wo)

    # TODO(synk): for very large images (> ~16 MiB per image) add a row-tiled
    # grid axis so the per-step x block stays within v7x's 64 MiB VMEM.
    out = pl.pallas_call(
        _region_mean_kernel,
        out_shape=jax.ShapeDtypeStruct((N, Ho, Wo), x.dtype),
        grid_spec=pltpu.PrefetchScalarGridSpec(
            num_scalar_prefetch=0,
            grid=(N,),
            in_specs=[
                # One full image per grid step (leading dim squeezed away).
                pl.BlockSpec((None, Hc, Wc), lambda n: (n, 0, 0)),
                # Constant block index -> fetched once, resident across steps.
                pl.BlockSpec((Ho, Hc), lambda n: (0, 0)),
                pl.BlockSpec((Wc, Wo), lambda n: (0, 0)),
            ],
            out_specs=pl.BlockSpec((None, Ho, Wo), lambda n: (n, 0, 0)),
        ),
        compiler_params=pltpu.CompilerParams(
            dimension_semantics=("parallel",),   # shards images across TCs on v7x
        ),
    )(x2, R, Cmat)

    return out[:, None, :, :]                   # (N, 1, Ho, Wo)


def _reference(x: jnp.ndarray, module_size: int) -> jnp.ndarray:
    """Pure-JAX reference of the strided conv (non-overlapping weighted patches)."""
    N, _, H, W = x.shape
    m = module_size
    Ho, Wo = H // m, W // m
    ind = _center_band(m)
    u = ind / jnp.sum(ind)
    w2d = jnp.outer(u, u)                       # == conv weight of the module
    patches = x[:, 0, :Ho * m, :Wo * m].reshape(N, Ho, m, Wo, m)
    return jnp.einsum("nhawb,ab->nhw", patches, w2d)[:, None, :, :]


if __name__ == "__main__":
    key = jax.random.PRNGKey(0)

    # Test 1: module_size=4 on a (2, 1, 16, 16) input.
    m1 = 4
    x1 = jax.random.normal(key, (2, 1, 16, 16), dtype=jnp.float32)
    out1 = jax.block_until_ready(region_mean_filter(x1, m1))
    assert out1.shape == (2, 1, 4, 4)
    assert jnp.allclose(out1, _reference(x1, m1), atol=1e-5, rtol=1e-5)

    # Test 2: module_size=6 on a (1, 1, 24, 24) input.
    m2 = 6
    x2 = jax.random.normal(jax.random.PRNGKey(1), (1, 1, 24, 24), dtype=jnp.float32)
    out2 = jax.block_until_ready(region_mean_filter(x2, m2))
    assert out2.shape == (1, 1, 4, 4)
    assert jnp.allclose(out2, _reference(x2, m2), atol=1e-5, rtol=1e-5)

    print("KERNEL_OK")
</pallas_src>

<mosaic_0001>
module attributes {stable_mosaic.version = 11 : i64} {
  func.func @_region_mean_kernel(%arg0: i32, %arg1: memref<1x16x16xf32, #tpu.memory_space<vmem>>, %arg2: memref<4x16xf32, #tpu.memory_space<vmem>>, %arg3: memref<16x4xf32, #tpu.memory_space<vmem>>, %arg4: memref<1x4x4xf32, #tpu.memory_space<vmem>>) attributes {dimension_semantics = [#tpu.dimension_semantics<parallel>], iteration_bounds = array<i64: 2>, scalar_prefetch = 0 : i64, scratch_operands = 0 : i64, tpu.core_type = #tpu.core_type<tc>, window_params = [{transform_indices = @transform_0, window_bounds = array<i64: 1, 16, 16>}, {pipeline_mode = #tpu.pipeline_mode<synchronous>, transform_indices = @transform_1, window_bounds = array<i64: 4, 16>}, {pipeline_mode = #tpu.pipeline_mode<synchronous>, transform_indices = @transform_2, window_bounds = array<i64: 16, 4>}, {transform_indices = @transform_3, window_bounds = array<i64: 1, 4, 4>}]} {
    %c0 = arith.constant 0 : index
    %c0_0 = arith.constant 0 : index
    %c0_1 = arith.constant 0 : index
    %0 = vector.load %arg1[%c0, %c0_0, %c0_1] : memref<1x16x16xf32, #tpu.memory_space<vmem>>, vector<1x16x16xf32>
    %1 = vector.shape_cast %0 : vector<1x16x16xf32> to vector<16x16xf32>
    %c0_2 = arith.constant 0 : index
    %c0_3 = arith.constant 0 : index
    %2 = vector.load %arg2[%c0_2, %c0_3] : memref<4x16xf32, #tpu.memory_space<vmem>>, vector<4x16xf32>
    %cst = arith.constant dense<0.000000e+00> : vector<4x16xf32>
    %3 = tpu.matmul %2, %1, %cst {dimension_numbers = #tpu.dot_dimension_numbers<[1], [0], [0], [1], [0, 0, 1, 1], [], []>} : vector<4x16xf32>, vector<16x16xf32>, vector<4x16xf32> -> vector<4x16xf32>
    %c0_4 = arith.constant 0 : index
    %c0_5 = arith.constant 0 : index
    %4 = vector.load %arg3[%c0_4, %c0_5] : memref<16x4xf32, #tpu.memory_space<vmem>>, vector<16x4xf32>
    %cst_6 = arith.constant dense<0.000000e+00> : vector<4x4xf32>
    %5 = tpu.matmul %3, %4, %cst_6 {dimension_numbers = #tpu.dot_dimension_numbers<[1], [0], [0], [1], [0, 0, 1, 1], [], []>} : vector<4x16xf32>, vector<16x4xf32>, vector<4x4xf32> -> vector<4x4xf32>
    %c0_7 = arith.constant 0 : index
    %c0_8 = arith.constant 0 : index
    %c0_9 = arith.constant 0 : index
    %6 = vector.load %arg4[%c0_7, %c0_8, %c0_9] : memref<1x4x4xf32, #tpu.memory_space<vmem>>, vector<1x4x4xf32>
    %7 = vector.shape_cast %6 : vector<1x4x4xf32> to vector<4x4xf32>
    %8 = vector.shape_cast %5 : vector<4x4xf32> to vector<1x4x4xf32>
    tpu.vector_store %arg4[%c0_7, %c0_8, %c0_9], %8 {strides = array<i32>} : memref<1x4x4xf32, #tpu.memory_space<vmem>>, vector<1x4x4xf32>,
    return
  }
  func.func @transform_0(%arg0: i32) -> (i32, i32, i32) {
    %c0_i32 = arith.constant 0 : i32
    %c0_i32_0 = arith.constant 0 : i32
    %c0_i32_1 = arith.constant 0 : i32
    return %arg0, %c0_i32, %c0_i32_0 : i32, i32, i32
  }
  func.func @transform_1(%arg0: i32) -> (i32, i32) {
    %c0_i32 = arith.constant 0 : i32
    %c0_i32_0 = arith.constant 0 : i32
    %c0_i32_1 = arith.constant 0 : i32
    return %c0_i32, %c0_i32_0 : i32, i32
  }
  func.func @transform_2(%arg0: i32) -> (i32, i32) {
    %c0_i32 = arith.constant 0 : i32
    %c0_i32_0 = arith.constant 0 : i32
    %c0_i32_1 = arith.constant 0 : i32
    return %c0_i32, %c0_i32_0 : i32, i32
  }
  func.func @transform_3(%arg0: i32) -> (i32, i32, i32) {
    %c0_i32 = arith.constant 0 : i32
    %c0_i32_0 = arith.constant 0 : i32
    %c0_i32_1 = arith.constant 0 : i32
    return %arg0, %c0_i32, %c0_i32_0 : i32, i32, i32
  }
}

</mosaic_0001>

<llo_original>
// kernel: tpu_custom_call.1
$region0: #{tpu_custom_call.1}
  #allocation0 [shape = 'u32[]', space=smem, size = 0x4, offset = 0x4, fixed_abs, tag = 'smem constant byte address 0x4 - core index']
  #allocation1 [shape = 'u32[144,128]{1,0:T(1,128)}', space=vmem, size = 0x12000, scoped, tag = 'internal scratch']
  %s0 = inlined_call_operand.hbm [shape: f32[2,16,16], index: 0, kind: input, shape index: {}]
  %s1 = inlined_call_operand.vmem [shape: f32[4,16], index: 1, kind: input, shape index: {}]
  %s2 = inlined_call_operand.vmem [shape: f32[16,4], index: 2, kind: input, shape index: {}]
  %s3 = inlined_call_operand.hbm [shape: f32[2,4,4], index: 3, kind: output, shape index: {}]
  %s4 = sld [smem:[#allocation0]]
  $region49: #{tpu_custom_call.1} parent=0
    _
  %s6 = ssub.s32 1, %s4
  %s7 = scalar_select 0, %s6, %s4
  $region1: #{tpu_custom_call.1} parent=0
    #allocation2 [shape = 'u8[16384]{0}', space=vmem, size = 0x4000, scoped, tag = 'input window, operand 0']
    #allocation3 [shape = 's32[2]{0}', space=sflag, size = 0x8, scoped, tag = 'scoped memory for tpu_custom_call.1']
    #allocation4 [shape = 's32[2]{0}', space=sflag, size = 0x8, scoped, tag = 'scoped memory for tpu_custom_call.1']
    #allocation5 [shape = 'u8[4096]{0}', space=vmem, size = 0x1000, scoped, tag = 'output window, operand 0']
    %8 = vsyncpa [#allocation3], 0
    %s9 = scalar_lea.sflag [#allocation3], 1
    %10 = vsyncpa %s9, 0
    %11 = vsyncpa [#allocation4], 0
    %s12 = scalar_lea.sflag [#allocation4], 1
    %13 = vsyncpa %s12, 0
    loop: start=0, step=1, limit=4
    $region2: #{tpu_custom_call.1} parent=1 // loop_pre_header
      _
    $region3: #{tpu_custom_call.1} parent=1 // loop_header
      %s15 = sphi 0, %s19
      %p16 = scmp.ge.s32.totalorder %s15, 4
      %s25 = sphi 0, %s27
      %s28 = sphi 0, %s25
      %s29 = sphi 0, %s28
      %s45 = sphi 0, %s29
      %s49 = sphi 0, %s49
      %s51 = sphi 0, %s49
      %s52 = sphi 0, %s51
      %s66 = sphi 0, %s52
      %s70 = sphi 0, %s70
      %s72 = sphi 0, %s70
      %s73 = sphi 0, %s72
      %s87 = sphi 0, %s73
      %s93 = sphi 0, %s95
      %s96 = sphi 0, %s93
      %s97 = sphi 0, %s96
      %s113 = sphi 0, %s97
    $region4: #{tpu_custom_call.1} parent=1 // loop_header_branch
      %18 = sbr.rel (%p16) target = $region8
    $region5: #{tpu_custom_call.1} parent=1 // loop_body
      %s20 = ssub.s32 %s15, 1
      %s21 = ssub.s32 %s15, 2
      %s22 = sadd.s32 %s15, 1
      %s23 = ssub.s32 %s15, %s22
      %p24 = scmp.eq.s32.totalorder %s23, 0
      %s26 = sadd.s32 %s25, 1
      %s27 = scalar_select %p24, %s25, %s26
      %p30 = pneg %p24
      %p31 = scmp.eq.s32.totalorder %s15, 1
      %p32 = por %p30, %p31
      %p33 = scmp.ne.s32.totalorder %s25, %s28
      %p34 = scmp.eq.s32.totalorder %s15, 0
      %p35 = por %p33, %p34
      %p36 = scmp.ne.s32.totalorder %s25, %s28
      %p37 = scmp.eq.s32.totalorder %s20, 1
      %p38 = por %p36, %p37
      %p39 = scmp.ne.s32.totalorder %s28, %s29
      %p40 = scmp.eq.s32.totalorder %s20, 0
      %p41 = por %p39, %p40
      %p42 = scmp.ne.s32.totalorder %s28, %s29
      %p43 = scmp.eq.s32.totalorder %s21, 1
      %p44 = por %p42, %p43
      %p46 = scmp.ne.s32.totalorder %s29, %s45
      %p47 = scmp.eq.s32.totalorder %s21, 0
      %p48 = por %p46, %p47
      %s50 = sadd.s32 %s49, 1
      %p53 = scmp.eq.s32.totalorder %s15, 1
      %p54 = scmp.ne.s32.totalorder %s49, %s51
      %p55 = scmp.eq.s32.totalorder %s15, 0
      %p56 = por %p54, %p55
      %p57 = scmp.ne.s32.totalorder %s49, %s51
      %p58 = scmp.eq.s32.totalorder %s20, 1
      %p59 = por %p57, %p58
      %p60 = scmp.ne.s32.totalorder %s51, %s52
      %p61 = scmp.eq.s32.totalorder %s20, 0
      %p62 = por %p60, %p61
      %p63 = scmp.ne.s32.totalorder %s51, %s52
      %p64 = scmp.eq.s32.totalorder %s21, 1
      %p65 = por %p63, %p64
      %p67 = scmp.ne.s32.totalorder %s52, %s66
      %p68 = scmp.eq.s32.totalorder %s21, 0
      %p69 = por %p67, %p68
      %s71 = sadd.s32 %s70, 1
      %p74 = scmp.eq.s32.totalorder %s15, 1
      %p75 = scmp.ne.s32.totalorder %s70, %s72
      %p76 = scmp.eq.s32.totalorder %s15, 0
      %p77 = por %p75, %p76
      %p78 = scmp.ne.s32.totalorder %s70, %s72
      %p79 = scmp.eq.s32.totalorder %s20, 1
      %p80 = por %p78, %p79
      %p81 = scmp.ne.s32.totalorder %s72, %s73
      %p82 = scmp.eq.s32.totalorder %s20, 0
      %p83 = por %p81, %p82
      %p84 = scmp.ne.s32.totalorder %s72, %s73
      %p85 = scmp.eq.s32.totalorder %s21, 1
      %p86 = por %p84, %p85
      %p88 = scmp.ne.s32.totalorder %s73, %s87
      %p89 = scmp.eq.s32.totalorder %s21, 0
      %p90 = por %p88, %p89
      %s91 = ssub.s32 %s15, %s22
      %p92 = scmp.eq.s32.totalorder %s91, 0
      %s94 = sadd.s32 %s93, 1
      %s95 = scalar_select %p92, %s93, %s94
      %p98 = pneg %p92
      %p99 = scmp.eq.s32.totalorder %s15, 1
      %p100 = por %p98, %p99
      %p101 = scmp.ne.s32.totalorder %s93, %s96
      %p102 = scmp.eq.s32.totalorder %s15, 0
      %p103 = por %p101, %p102
      %p104 = scmp.ne.s32.totalorder %s93, %s96
      %p105 = scmp.eq.s32.totalorder %s20, 1
      %p106 = por %p104, %p105
      %p107 = scmp.ne.s32.totalorder %s96, %s97
      %p108 = scmp.eq.s32.totalorder %s20, 0
      %p109 = por %p107, %p108
      %p110 = scmp.ne.s32.totalorder %s96, %s97
      %p111 = scmp.eq.s32.totalorder %s21, 1
      %p112 = por %p110, %p111
      %p114 = scmp.ne.s32.totalorder %s97, %s113
      %p115 = scmp.eq.s32.totalorder %s21, 0
      %p116 = por %p114, %p115
      %p117 = scmp.le.s32.totalorder 1, %s15
      %p118 = scmp.lt.s32.totalorder %s15, 3
      %p119 = pnand %p117, %p118
      %p120 = pneg %p119
      // Predicated region
      $region9: #{tpu_custom_call.1} parent=5 // pred_check
        _
      $region10: #{tpu_custom_call.1} parent=5 // pred_check_branch
        %122 = sbr.rel (%p119) target = $region12
      $region11: #{tpu_custom_call.1} parent=5 // pred_region
        %s123 = ssub.s32 %s15, 1
        // Predicated region
        $region13: #{tpu_custom_call.1} parent=11 // pred_check
          %p124 = pneg %p62
        $region14: #{tpu_custom_call.1} parent=11 // pred_check_branch
          %126 = sbr.rel (%p124) target = $region16
        $region15: #{tpu_custom_call.1} parent=11 // pred_region
          _
        $region16: #{tpu_custom_call.1} parent=11 // pred_fallthru
          _
        // Predicated region
        $region17: #{tpu_custom_call.1} parent=11 // pred_check
          %p127 = pneg %p83
        $region18: #{tpu_custom_call.1} parent=11 // pred_check_branch
          %129 = sbr.rel (%p127) target = $region20
        $region19: #{tpu_custom_call.1} parent=11 // pred_region
          _
        $region20: #{tpu_custom_call.1} parent=11 // pred_fallthru
          _
      $region12: #{tpu_custom_call.1} parent=5 // pred_fallthru
        _
      %p130 = scmp.lt.s32.totalorder %s15, 2
      // Predicated region
      $region21: #{tpu_custom_call.1} parent=5 // pred_check
        %p131 = pneg %p130
      $region22: #{tpu_custom_call.1} parent=5 // pred_check_branch
        %133 = sbr.rel (%p131) target = $region24
      $region23: #{tpu_custom_call.1} parent=5 // pred_region
        // Predicated region
        $region25: #{tpu_custom_call.1} parent=23 // pred_check
          %p134 = pneg %p35
        $region26: #{tpu_custom_call.1} parent=23 // pred_check_branch
          %136 = sbr.rel (%p134) target = $region28
        $region27: #{tpu_custom_call.1} parent=23 // pred_region
          %s137 = sand.u32 %s25, 1
          %s138 = scalar_lea.sflag [#allocation3], %s137
          %s139 = sand.u32 %s25, 1
          %s140 = smul.addr %s139, 16
          %s141 = scalar_lea.vmem [#allocation2], %s140
          %s143 = ssub.s32 256, 256
          %144 = vsyncadd %s138, %s143
          %s145 = smul.addr %s15, 2
          %s146 = smul.addr %s145, 128
          %s147 = scalar_lea.hbm %s0, %s146
          %s148 = sshll.u32 %s141, 4
          %s149 = int_to_ptr.vmem [resolvable:$true] %s148
          %154 = dma.hbm_to_vmem [thread:$0]  %s147, 256, %s149, %s138, 128, 128, 8
        $region28: #{tpu_custom_call.1} parent=23 // pred_fallthru
          _
      $region24: #{tpu_custom_call.1} parent=5 // pred_fallthru
        _
      %p155 = scmp.le.s32.totalorder 1, %s15
      %p156 = scmp.lt.s32.totalorder %s15, 3
      %p157 = pnand %p155, %p156
      %p158 = pneg %p157
      // Predicated region
      $region29: #{tpu_custom_call.1} parent=5 // pred_check
        _
      $region30: #{tpu_custom_call.1} parent=5 // pred_check_branch
        %160 = sbr.rel (%p157) target = $region32
      $region31: #{tpu_custom_call.1} parent=5 // pred_region
        %s161 = ssub.s32 %s15, 1
        %s162 = sand.u32 %s28, 1
        %s163 = scalar_lea.sflag [#allocation3], %s162
        %s164 = sand.u32 %s28, 1
        %s165 = smul.addr %s164, 16
        %s166 = scalar_lea.vmem [#allocation2], %s165
        // Predicated region
        $region33: #{tpu_custom_call.1} parent=31 // pred_check
          %p167 = pneg %p41
        $region34: #{tpu_custom_call.1} parent=31 // pred_check_branch
          %169 = sbr.rel (%p167) target = $region36
        $region35: #{tpu_custom_call.1} parent=31 // pred_region
          %170 = dma.done %s163, 256
        $region36: #{tpu_custom_call.1} parent=31 // pred_fallthru
          _
        %s171 = sand.u32 %s28, 1
        %s172 = scalar_lea.sflag [#allocation3], %s171
        %s173 = sand.u32 %s28, 1
        %s174 = smul.addr %s173, 16
        %s175 = scalar_lea.vmem [#allocation2], %s174
        %p176 = pneg %p41
        %p177 = pneg %p38
        %p178 = pneg %p62
        %p179 = pneg %p59
        %p180 = pneg %p83
        %p181 = pneg %p80
        %p182 = pneg %p109
        %p183 = pneg %p106
        %s184 = sand.u32 %s96, 1
        %s185 = scalar_lea.sflag [#allocation4], %s184
        %s186 = sand.u32 %s96, 1
        %s187 = smul.addr %s186, 4
        %s188 = scalar_lea.vmem [#allocation5], %s187
        %v189 = vld [vmem:[%s166] sm:$0xff]
        %v190 = vld [vmem:[%s166 + $0x8] sm:$0xff]
        %v191 = vld [vmem:[%s1] sm:$0xf]
        %vm192 = vcmask 130048
        %v194 = vsel %vm192, %v191, 0
        %196 = vmatprep.subr.mxu0 0.0
        %197 = vmatpush1.msra.mxu0 %v189
        %198 = vmatprep.subr.mxu0 0.0
        %199 = vmatpush1.msra.mxu0 %v190
        %200 = vmatprep.subr.mxu0 0.0
        %201 = vmatpush1.msra.mxu0 0.0
        %202 = vmatprep.subr.mxu0 0.0
        %203 = vmatpush1.msra.mxu0 0.0
        %204 = vmatprep.subr.mxu0 0.0
        %205 = vmatpush1.msra.mxu0 0.0
        %206 = vmatprep.subr.mxu0 0.0
        %207 = vmatpush1.msra.mxu0 0.0
        %208 = vmatprep.subr.mxu0 0.0
        %209 = vmatpush1.msra.mxu0 0.0
        %210 = vmatprep.subr.mxu0 0.0
        %211 = vmatpush1.msra.mxu0 0.0
        %212 = vmatprep.subr.mxu0 0.0
        %213 = vmatpush1.msra.mxu0 0.0
        %214 = vmatprep.subr.mxu0 0.0
        %215 = vmatpush1.msra.mxu0 0.0
        %216 = vmatprep.subr.mxu0 0.0
        %217 = vmatpush1.msra.mxu0 0.0
        %218 = vmatprep.subr.mxu0 0.0
        %219 = vmatpush1.msra.mxu0 0.0
        %220 = vmatprep.subr.mxu0 0.0
        %221 = vmatpush1.msra.mxu0 0.0
        %222 = vmatprep.subr.mxu0 0.0
        %223 = vmatpush1.msra.mxu0 0.0
        %224 = vmatprep.subr.mxu0 0.0
        %225 = vmatpush1.msra.mxu0 0.0
        %226 = vmatprep.subr.mxu0 0.0
        %227 = vmatpush1.msra.mxu0 0.0
        %228 = vmatprep.subr.mxu0 0.0
        %229 = vmatpush1.msra.mxu0 0.0
        %230 = vmatprep.subr.mxu0 0.0
        %231 = vmatpush1.msra.mxu0 0.0
        %232 = vmatprep.subr.mxu0 0.0
        %233 = vmatpush1.msra.mxu0 0.0
        %234 = vmatprep.subr.mxu0 0.0
        %235 = vmatpush1.msra.mxu0 0.0
        %236 = vmatprep.subr.mxu0 0.0
        %237 = vmatpush1.msra.mxu0 0.0
        %238 = vmatprep.subr.mxu0 0.0
        %239 = vmatpush1.msra.mxu0 0.0
        %240 = vmatprep.subr.mxu0 0.0
        %241 = vmatpush1.msra.mxu0 0.0
        %242 = vmatprep.subr.mxu0 0.0
        %243 = vmatpush1.msra.mxu0 0.0
        %244 = vmatprep.subr.mxu0 0.0
        %245 = vmatpush1.msra.mxu0 0.0
        %246 = vmatprep.subr.mxu0 0.0
        %247 = vmatpush1.msra.mxu0 0.0
        %248 = vmatprep.subr.mxu0 0.0
        %249 = vmatpush1.msra.mxu0 0.0
        %250 = vmatprep.subr.mxu0 0.0
        %251 = vmatpush1.msra.mxu0 0.0
        %252 = vmatprep.subr.mxu0 0.0
        %253 = vmatpush1.msra.mxu0 0.0
        %254 = vmatprep.subr.mxu0 0.0
        %255 = vmatpush1.msra.mxu0 0.0
        %256 = vmatprep.subr.mxu0 0.0
        %257 = vmatpush1.msra.mxu0 0.0
        %258 = vmatprep.subr.mxu0 0.0
        %259 = vmatpush1.msra.mxu0 0.0
        %260 = vmatprep.mubr.f32.mxu0 0.0
        %261 = vmatmul.mubr.f32.gmra.mrb[0].mxu0 %v194
        %v262 = vpop.f32.mrb[0].mxu0
        %v263 = vadd.f32 0.0, %v262
        %v264 = vpop.f32.mrb[0].mxu0
        %265 = vdwg.mxu0
        %v266 = vld [vmem:[%s2] sm:$0xff]
        %v267 = vld [vmem:[%s2 + $0x8] sm:$0xff]
        %v269 = vsel %vm192, %v263, 0
        %271 = vmatprep.subr.mxu0 0.0
        %272 = vmatpush1.msra.mxu0 %v266
        %273 = vmatprep.subr.mxu0 0.0
        %274 = vmatpush1.msra.mxu0 %v267
        %275 = vmatprep.subr.mxu0 0.0
        %276 = vmatpush1.msra.mxu0 0.0
        %277 = vmatprep.subr.mxu0 0.0
        %278 = vmatpush1.msra.mxu0 0.0
        %279 = vmatprep.subr.mxu0 0.0
        %280 = vmatpush1.msra.mxu0 0.0
        %281 = vmatprep.subr.mxu0 0.0
        %282 = vmatpush1.msra.mxu0 0.0
        %283 = vmatprep.subr.mxu0 0.0
        %284 = vmatpush1.msra.mxu0 0.0
        %285 = vmatprep.subr.mxu0 0.0
        %286 = vmatpush1.msra.mxu0 0.0
        %287 = vmatprep.subr.mxu0 0.0
        %288 = vmatpush1.msra.mxu0 0.0
        %289 = vmatprep.subr.mxu0 0.0
        %290 = vmatpush1.msra.mxu0 0.0
        %291 = vmatprep.subr.mxu0 0.0
        %292 = vmatpush1.msra.mxu0 0.0
        %293 = vmatprep.subr.mxu0 0.0
        %294 = vmatpush1.msra.mxu0 0.0
        %295 = vmatprep.subr.mxu0 0.0
        %296 = vmatpush1.msra.mxu0 0.0
        %297 = vmatprep.subr.mxu0 0.0
        %298 = vmatpush1.msra.mxu0 0.0
        %299 = vmatprep.subr.mxu0 0.0
        %300 = vmatpush1.msra.mxu0 0.0
        %301 = vmatprep.subr.mxu0 0.0
        %302 = vmatpush1.msra.mxu0 0.0
        %303 = vmatprep.subr.mxu0 0.0
        %304 = vmatpush1.msra.mxu0 0.0
        %305 = vmatprep.subr.mxu0 0.0
        %306 = vmatpush1.msra.mxu0 0.0
        %307 = vmatprep.subr.mxu0 0.0
        %308 = vmatpush1.msra.mxu0 0.0
        %309 = vmatprep.subr.mxu0 0.0
        %310 = vmatpush1.msra.mxu0 0.0
        %311 = vmatprep.subr.mxu0 0.0
        %312 = vmatpush1.msra.mxu0 0.0
        %313 = vmatprep.subr.mxu0 0.0
        %314 = vmatpush1.msra.mxu0 0.0
        %315 = vmatprep.subr.mxu0 0.0
        %316 = vmatpush1.msra.mxu0 0.0
        %317 = vmatprep.subr.mxu0 0.0
        %318 = vmatpush1.msra.mxu0 0.0
        %319 = vmatprep.subr.mxu0 0.0
        %320 = vmatpush1.msra.mxu0 0.0
        %321 = vmatprep.subr.mxu0 0.0
        %322 = vmatpush1.msra.mxu0 0.0
        %323 = vmatprep.subr.mxu0 0.0
        %324 = vmatpush1.msra.mxu0 0.0
        %325 = vmatprep.subr.mxu0 0.0
        %326 = vmatpush1.msra.mxu0 0.0
        %327 = vmatprep.subr.mxu0 0.0
        %328 = vmatpush1.msra.mxu0 0.0
        %329 = vmatprep.subr.mxu0 0.0
        %330 = vmatpush1.msra.mxu0 0.0
        %331 = vmatprep.subr.mxu0 0.0
        %332 = vmatpush1.msra.mxu0 0.0
        %333 = vmatprep.subr.mxu0 0.0
        %334 = vmatpush1.msra.mxu0 0.0
        %335 = vmatprep.mubr.f32.mxu0 0.0
        %336 = vmatmul.mubr.f32.gmra.mrb[0].mxu0 %v269
        %v337 = vpop.f32.mrb[0].mxu0
        %v338 = vadd.f32 0.0, %v337
        %v339 = vpop.f32.mrb[0].mxu0
        %340 = vdwg.mxu0
        %vm341 = vcmask 27648
        %342 = vst.msk [vmem:[%s188] sm:$0xf] %vm341, %v338
        %s343 = sand.u32 %s96, 1
        %s344 = scalar_lea.sflag [#allocation4], %s343
        %s345 = sand.u32 %s96, 1
        %s346 = smul.addr %s345, 4
        %s347 = scalar_lea.vmem [#allocation5], %s346
        // Predicated region
        $region37: #{tpu_custom_call.1} parent=31 // pred_check
          %p348 = pneg %p106
        $region38: #{tpu_custom_call.1} parent=31 // pred_check_branch
          %350 = sbr.rel (%p348) target = $region40
        $region39: #{tpu_custom_call.1} parent=31 // pred_region
          %s352 = ssub.s32 64, 64
          %353 = vsyncadd %s344, %s352
          %s354 = smul.addr %s20, 64
          %s355 = scalar_lea.hbm %s3, %s354
          %s357 = sshll.u32 %s347, 4
          %s358 = int_to_ptr.vmem [resolvable:$true] %s357
          %360 = dma.vmem_to_hbm [thread:$0]  %s358, 64, %s355, %s344
        $region40: #{tpu_custom_call.1} parent=31 // pred_fallthru
          _
      $region32: #{tpu_custom_call.1} parent=5 // pred_fallthru
        _
      %p361 = scmp.le.s32.totalorder 2, %s15
      // Predicated region
      $region41: #{tpu_custom_call.1} parent=5 // pred_check
        %p362 = pneg %p361
      $region42: #{tpu_custom_call.1} parent=5 // pred_check_branch
        %364 = sbr.rel (%p362) target = $region44
      $region43: #{tpu_custom_call.1} parent=5 // pred_region
        %s365 = ssub.s32 %s15, 2
        // Predicated region
        $region45: #{tpu_custom_call.1} parent=43 // pred_check
          %p366 = pneg %p112
        $region46: #{tpu_custom_call.1} parent=43 // pred_check_branch
          %368 = sbr.rel (%p366) target = $region48
        $region47: #{tpu_custom_call.1} parent=43 // pred_region
          %s369 = sand.u32 %s97, 1
          %s370 = scalar_lea.sflag [#allocation4], %s369
          %s371 = sand.u32 %s97, 1
          %s372 = smul.addr %s371, 4
          %s373 = scalar_lea.vmem [#allocation5], %s372
          %374 = dma.done %s370, 64
        $region48: #{tpu_custom_call.1} parent=43 // pred_fallthru
          _
      $region44: #{tpu_custom_call.1} parent=5 // pred_fallthru
        _
    $region6: #{tpu_custom_call.1} parent=1 // loop_footer
      %s19 = sadd.s32 1, %s15
    $region7: #{tpu_custom_call.1} parent=1 // loop_footer_branch
      %14 = sbr.rel target = $region3
    $region8: #{tpu_custom_call.1} parent=1 // loop_exit
      _
    %375 = vsyncpa [#allocation3], 1
    %s376 = scalar_lea.sflag [#allocation3], 1
    %377 = vsyncpa %s376, 1
    %378 = vsyncpa [#allocation4], 1
    %s379 = scalar_lea.sflag [#allocation4], 1
    %380 = vsyncpa %s379, 1

</llo_original>
